<compile_context>
chip_gen: v5e
topology: v5e:2x2
jax: 0.10.0
libtpu: 0.0.40
codegen_flags: <defaults>
</compile_context>

<pallas_src>
import functools

import jax
import jax.numpy as jnp
import numpy as np
from jax.experimental import pallas as pl
from jax.experimental.pallas import tpu as pltpu


def _anfis_kernel(x_ref, mu_ref, inv_sig2_ref, theta_eps_ref, om_theta_ref,
                  w1t_ref, cbt_ref, swt_ref, b1t_ref, w2t_ref, b2t_ref,
                  out_ref):
    xb = x_ref[...]                  # (n, 1, Bt)  batch in the lane dimension
    mu = mu_ref[...]                 # (n, r, 1)
    inv_sig2 = inv_sig2_ref[...]     # (n, r, 1)   = 1 / sigma^2
    theta_eps = theta_eps_ref[...]   # (n, r, 1)   = sigmoid(s) + eps
    om_theta = om_theta_ref[...]     # (n, r, 1)   = 1 - sigmoid(s)

    n = xb.shape[0]
    bt = xb.shape[2]
    r = mu.shape[1]
    n_classes = cbt_ref.shape[0]

    eps = jnp.float32(1e-6)

    # ---- Layer 1: fuzzification  exp(-(x - mu)^2 / sigma^2) -> (n, r, Bt) ----
    diff = xb - mu
    o1 = jnp.exp(-(diff * diff) * inv_sig2)

    # ---- Layer 2: selection (exact divide; accuracy-critical) ----
    o2 = (o1 + eps) / (om_theta * o1 + theta_eps)

    # ---- Layer 3: rule strength = min over features (pairwise VALU mins) ----
    o3 = o2[0]
    for i in range(1, n):
        o3 = jnp.minimum(o3, o2[i])                      # (r, Bt)

    # ---- Layer 4: L1 normalize over rules (sublane axis, r == 8, dense) ----
    l1 = jnp.maximum(jnp.sum(jnp.abs(o3), axis=0, keepdims=True), 1e-12)
    wnorm = o3 / l1                                      # (r, Bt)

    # ---- Consequence outer product: g[i*r+k, b] = x[b,i] * wnorm[k,b] ----
    # reshape is tile-aligned since r == 8 fills one sublane group.
    g = (xb * wnorm[None]).reshape(n * r, bt)            # (n*r, Bt)

    # ---- MXU: MLP hidden + consequence (rule-sum rides on the K dimension) ----
    hid = jnp.dot(w1t_ref[...], wnorm,
                  preferred_element_type=jnp.float32)    # (H, Bt)
    o6 = (jnp.dot(cbt_ref[...], wnorm, preferred_element_type=jnp.float32)
          + jnp.dot(swt_ref[...], g, preferred_element_type=jnp.float32))   # (C, Bt)

    # ---- MLP reconstruction: w2^T ReLU(w1^T wnorm + b1) + b2 ----
    h = jnp.maximum(hid + b1t_ref[...], 0.0)
    rec = jnp.dot(w2t_ref[...], h,
                  preferred_element_type=jnp.float32) + b2t_ref[...]        # (n, Bt)

    # ---- Consequence L1 normalize over classes ----
    l6 = jnp.maximum(jnp.sum(jnp.abs(o6), axis=0, keepdims=True), 1e-12)
    o6 = o6 / l6

    # Two static slice stores into the lane-dense (C + n, Bt) output block.
    out_ref[:n_classes, :] = o6.astype(out_ref.dtype)
    out_ref[n_classes:, :] = rec.astype(out_ref.dtype)


def _round_up(a, m):
    return ((a + m - 1) // m) * m


@functools.partial(jax.jit, static_argnames=("block_b",))
def anfis_forward(x, mu, sigma, s, w1, b1, w2, b2, cw, cb, *, block_b=512):
    """ANFIS forward.

    x: (B, n);  mu/sigma/s: (n, r);  MLP weights pre-transposed to (in, out):
    w1 (r, hidden), b1 (1, hidden), w2 (hidden, n), b2 (1, n);
    consequence: cw (n, r, C), cb (r, C).
    Returns (output6 (B, C), reconstruct (B, n)).
    """
    B, n = x.shape
    r = mu.shape[1]
    C = cw.shape[2]
    H = w1.shape[1]
    f32 = jnp.float32

    # ---- parameter-only precompute (hoisted out of the kernel); rule axis on
    # sublanes, size-1 trailing dim broadcasts along the batch lanes ----
    mu3 = mu.reshape(n, r, 1).astype(f32)
    inv_sig2 = (1.0 / (sigma * sigma)).reshape(n, r, 1).astype(f32)
    theta = jax.nn.sigmoid(s.astype(f32))
    theta_eps = (theta + 1e-6).reshape(n, r, 1)
    om_theta = (1.0 - theta).reshape(n, r, 1)

    # NOTE: the torch module scales cw by the *raw* selection logits s
    # (the selection layer returns self._s, not sigmoid(s)) -- keep that.
    swT = (s.astype(f32)[:, :, None] * cw.astype(f32)).reshape(n * r, C).T    # (C, n*r)
    cbT = cb.T.astype(f32)                                                    # (C, r)
    w1T = w1.T.astype(f32)                                                    # (H, r)
    b1T = b1.reshape(H, 1).astype(f32)
    w2T = w2.T.astype(f32)                                                    # (n, H)
    b2T = b2.reshape(n, 1).astype(f32)

    # ---- batch tiling: batch in lanes, Bt a multiple of 128 ----
    block_b = max(128, _round_up(block_b, 128))
    B_lane = _round_up(B, 128)
    Bt = min(block_b, B_lane)
    # keep >= 2 parallel grid steps when the batch allows (v7x: 2 TensorCores)
    if B_lane >= 256 and B_lane // Bt < 2:
        Bt = _round_up(B_lane // 2, 128)
    B_pad = _round_up(B, Bt)

    xT = jnp.transpose(x.astype(f32))                    # (n, B)
    if B_pad != B:
        xT = jnp.pad(xT, ((0, 0), (0, B_pad - B)))
    xT = xT.reshape(n, 1, B_pad)

    grid = (B_pad // Bt,)

    def full_spec(arr):
        zeros = (0,) * arr.ndim
        return pl.BlockSpec(arr.shape, lambda i, _z=zeros: _z)

    packed = pl.pallas_call(
        _anfis_kernel,
        grid=grid,
        in_specs=[
            pl.BlockSpec((n, 1, Bt), lambda i: (0, 0, i)),   # x (batch in lanes)
            full_spec(mu3),                                  # mu
            full_spec(inv_sig2),                             # 1 / sigma^2
            full_spec(theta_eps),                            # sigmoid(s) + eps
            full_spec(om_theta),                             # 1 - sigmoid(s)
            full_spec(w1T),                                  # (H, r)
            full_spec(cbT),                                  # (C, r)
            full_spec(swT),                                  # (C, n*r)
            full_spec(b1T),                                  # (H, 1)
            full_spec(w2T),                                  # (n, H)
            full_spec(b2T),                                  # (n, 1)
        ],
        out_specs=pl.BlockSpec((C + n, Bt), lambda i: (0, i)),
        out_shape=jax.ShapeDtypeStruct((C + n, B_pad), jnp.float32),
        compiler_params=pltpu.CompilerParams(
            dimension_semantics=("parallel",)),
    )(xT, mu3, inv_sig2, theta_eps, om_theta, w1T, cbT, swT, b1T, w2T, b2T)

    out6 = packed[:C, :B].T
    rec = packed[C:, :B].T
    return out6, rec


def anfis_reference(x, mu, sigma, s, w1, b1, w2, b2, cw, cb):
    """Pure-JAX mirror of the PyTorch ANFIS.forward for validation.

    Matmuls use Precision.HIGHEST so the reference is true-f32 (XLA's default
    f32 matmul on TPU is lower precision than the Mosaic/Pallas MXU path).
    """
    hp = jax.lax.Precision.HIGHEST
    o1 = jnp.exp(-jnp.square(x[:, :, None] - mu[None]) / jnp.square(sigma)[None])
    theta = 1.0 / (1.0 + jnp.exp(-s))
    eps = 1e-6
    o2 = (o1 + eps) / ((1.0 - theta)[None] * o1 + theta[None] + eps)
    o3 = jnp.min(o2, axis=1)
    wnorm = o3 / jnp.maximum(jnp.sum(jnp.abs(o3), axis=1, keepdims=True), 1e-12)
    h = jnp.maximum(jnp.dot(wnorm, w1, precision=hp) + b1, 0.0)
    rec = jnp.dot(h, w2, precision=hp) + b2
    proj = jnp.einsum('ij,jkl->ikl', x, s[:, :, None] * cw, precision=hp) + cb[None]
    o5 = wnorm[:, :, None] * proj
    o6 = jnp.sum(o5, axis=1)
    o6 = o6 / jnp.maximum(jnp.sum(jnp.abs(o6), axis=1, keepdims=True), 1e-12)
    return o6, rec


if __name__ == "__main__":
    # Config: n_input=4, 8 membership functions (rules), 4 classes, MLP hidden=12.
    B, N_IN, RULES, CLASSES, HIDDEN = 8, 4, 8, 4, 12

    key = jax.random.PRNGKey(0)
    keys = jax.random.split(key, 9)

    x = jax.random.normal(keys[0], (B, N_IN), dtype=jnp.float32)

    # FuzzyLayer params (membfuncs would supply these; deterministic synthetic init)
    mu = jax.random.uniform(keys[1], (N_IN, RULES), minval=-1.0, maxval=1.0, dtype=jnp.float32)
    sigma = jax.random.uniform(keys[2], (N_IN, RULES), minval=0.5, maxval=1.5, dtype=jnp.float32)

    # Selection layer param: torch.full((n, rules), 1.5)
    s = jnp.full((N_IN, RULES), 1.5, dtype=jnp.float32)

    # MLP params, pre-transposed to (in, out)
    w1 = jax.random.uniform(keys[3], (RULES, HIDDEN), minval=-0.5, maxval=0.5, dtype=jnp.float32)
    b1 = jax.random.uniform(keys[4], (1, HIDDEN), minval=-0.1, maxval=0.1, dtype=jnp.float32)
    w2 = jax.random.uniform(keys[5], (HIDDEN, N_IN), minval=-0.5, maxval=0.5, dtype=jnp.float32)
    b2 = jax.random.uniform(keys[6], (1, N_IN), minval=-0.1, maxval=0.1, dtype=jnp.float32)

    # Consequence layer params: uniform(-0.5, 0.5)
    cw = jax.random.uniform(keys[7], (N_IN, RULES, CLASSES), minval=-0.5, maxval=0.5, dtype=jnp.float32)
    cb = jax.random.uniform(keys[8], (RULES, CLASSES), minval=-0.5, maxval=0.5, dtype=jnp.float32)

    # Small batch (single grid step).
    out6, rec = anfis_forward(x, mu, sigma, s, w1, b1, w2, b2, cw, cb)
    jax.block_until_ready((out6, rec))
    ref6, ref_rec = anfis_reference(x, mu, sigma, s, w1, b1, w2, b2, cw, cb)
    np.testing.assert_allclose(np.asarray(out6), np.asarray(ref6), rtol=2e-3, atol=2e-3)
    np.testing.assert_allclose(np.asarray(rec), np.asarray(ref_rec), rtol=2e-3, atol=2e-3)

    # Larger, non-multiple batch: exercises batch tiling, padding and grid > 1.
    xb = jax.random.normal(jax.random.PRNGKey(1), (200, N_IN), dtype=jnp.float32)
    out6b, recb = anfis_forward(xb, mu, sigma, s, w1, b1, w2, b2, cw, cb)
    jax.block_until_ready((out6b, recb))
    ref6b, ref_recb = anfis_reference(xb, mu, sigma, s, w1, b1, w2, b2, cw, cb)
    np.testing.assert_allclose(np.asarray(out6b), np.asarray(ref6b), rtol=2e-3, atol=2e-3)
    np.testing.assert_allclose(np.asarray(recb), np.asarray(ref_recb), rtol=2e-3, atol=2e-3)

    print("KERNEL_OK")
</pallas_src>

<mosaic_0001>
module attributes {stable_mosaic.version = 11 : i64} {
  func.func @_anfis_kernel(%arg0: i32, %arg1: memref<4x1x128xf32, #tpu.memory_space<vmem>>, %arg2: memref<4x8x1xf32, #tpu.memory_space<vmem>>, %arg3: memref<4x8x1xf32, #tpu.memory_space<vmem>>, %arg4: memref<4x8x1xf32, #tpu.memory_space<vmem>>, %arg5: memref<4x8x1xf32, #tpu.memory_space<vmem>>, %arg6: memref<12x8xf32, #tpu.memory_space<vmem>>, %arg7: memref<4x8xf32, #tpu.memory_space<vmem>>, %arg8: memref<4x32xf32, #tpu.memory_space<vmem>>, %arg9: memref<12x1xf32, #tpu.memory_space<vmem>>, %arg10: memref<4x12xf32, #tpu.memory_space<vmem>>, %arg11: memref<4x1xf32, #tpu.memory_space<vmem>>, %arg12: memref<8x128xf32, #tpu.memory_space<vmem>>) attributes {dimension_semantics = [#tpu.dimension_semantics<parallel>], iteration_bounds = array<i64: 1>, scalar_prefetch = 0 : i64, scratch_operands = 0 : i64, tpu.core_type = #tpu.core_type<tc>, window_params = [{transform_indices = @transform_0, window_bounds = array<i64: 4, 1, 128>}, {pipeline_mode = #tpu.pipeline_mode<synchronous>, transform_indices = @transform_1, window_bounds = array<i64: 4, 8, 1>}, {pipeline_mode = #tpu.pipeline_mode<synchronous>, transform_indices = @transform_2, window_bounds = array<i64: 4, 8, 1>}, {pipeline_mode = #tpu.pipeline_mode<synchronous>, transform_indices = @transform_3, window_bounds = array<i64: 4, 8, 1>}, {pipeline_mode = #tpu.pipeline_mode<synchronous>, transform_indices = @transform_4, window_bounds = array<i64: 4, 8, 1>}, {pipeline_mode = #tpu.pipeline_mode<synchronous>, transform_indices = @transform_5, window_bounds = array<i64: 12, 8>}, {pipeline_mode = #tpu.pipeline_mode<synchronous>, transform_indices = @transform_6, window_bounds = array<i64: 4, 8>}, {pipeline_mode = #tpu.pipeline_mode<synchronous>, transform_indices = @transform_7, window_bounds = array<i64: 4, 32>}, {pipeline_mode = #tpu.pipeline_mode<synchronous>, transform_indices = @transform_8, window_bounds = array<i64: 12, 1>}, {pipeline_mode = #tpu.pipeline_mode<synchronous>, transform_indices = @transform_9, window_bounds = array<i64: 4, 12>}, {pipeline_mode = #tpu.pipeline_mode<synchronous>, transform_indices = @transform_10, window_bounds = array<i64: 4, 1>}, {transform_indices = @transform_11, window_bounds = array<i64: 8, 128>}]} {
    %c0 = arith.constant 0 : index
    %c0_0 = arith.constant 0 : index
    %c0_1 = arith.constant 0 : index
    %0 = vector.load %arg1[%c0, %c0_0, %c0_1] : memref<4x1x128xf32, #tpu.memory_space<vmem>>, vector<4x1x128xf32>
    %c0_2 = arith.constant 0 : index
    %c0_3 = arith.constant 0 : index
    %c0_4 = arith.constant 0 : index
    %1 = vector.load %arg2[%c0_2, %c0_3, %c0_4] : memref<4x8x1xf32, #tpu.memory_space<vmem>>, vector<4x8x1xf32>
    %c0_5 = arith.constant 0 : index
    %c0_6 = arith.constant 0 : index
    %c0_7 = arith.constant 0 : index
    %2 = vector.load %arg3[%c0_5, %c0_6, %c0_7] : memref<4x8x1xf32, #tpu.memory_space<vmem>>, vector<4x8x1xf32>
    %c0_8 = arith.constant 0 : index
    %c0_9 = arith.constant 0 : index
    %c0_10 = arith.constant 0 : index
    %3 = vector.load %arg4[%c0_8, %c0_9, %c0_10] : memref<4x8x1xf32, #tpu.memory_space<vmem>>, vector<4x8x1xf32>
    %c0_11 = arith.constant 0 : index
    %c0_12 = arith.constant 0 : index
    %c0_13 = arith.constant 0 : index
    %4 = vector.load %arg5[%c0_11, %c0_12, %c0_13] : memref<4x8x1xf32, #tpu.memory_space<vmem>>, vector<4x8x1xf32>
    %5 = vector.broadcast %0 : vector<4x1x128xf32> to vector<4x8x128xf32>
    %6 = vector.broadcast %1 : vector<4x8x1xf32> to vector<4x8x128xf32>
    %7 = arith.subf %5, %6 : vector<4x8x128xf32>
    %8 = arith.mulf %7, %7 : vector<4x8x128xf32>
    %cst = arith.constant 0.000000e+00 : f32
    %9 = vector.broadcast %cst : f32 to vector<4x8x128xf32>
    %10 = arith.subf %9, %8 : vector<4x8x128xf32>
    %11 = vector.broadcast %2 : vector<4x8x1xf32> to vector<4x8x128xf32>
    %12 = arith.mulf %10, %11 : vector<4x8x128xf32>
    %13 = math.exp %12 : vector<4x8x128xf32>
    %cst_14 = arith.constant 9.99999997E-7 : f32
    %14 = vector.broadcast %cst_14 : f32 to vector<4x8x128xf32>
    %15 = arith.addf %13, %14 : vector<4x8x128xf32>
    %16 = vector.broadcast %4 : vector<4x8x1xf32> to vector<4x8x128xf32>
    %17 = arith.mulf %16, %13 : vector<4x8x128xf32>
    %18 = vector.broadcast %3 : vector<4x8x1xf32> to vector<4x8x128xf32>
    %19 = arith.addf %17, %18 : vector<4x8x128xf32>
    %20 = arith.divf %15, %19 : vector<4x8x128xf32>
    %21 = vector.extract_strided_slice %20 {offsets = [0, 0, 0], sizes = [1, 8, 128], strides = [1, 1, 1]} : vector<4x8x128xf32> to vector<1x8x128xf32>
    %22 = vector.shape_cast %21 : vector<1x8x128xf32> to vector<8x128xf32>
    %23 = vector.extract_strided_slice %20 {offsets = [1, 0, 0], sizes = [1, 8, 128], strides = [1, 1, 1]} : vector<4x8x128xf32> to vector<1x8x128xf32>
    %24 = vector.shape_cast %23 : vector<1x8x128xf32> to vector<8x128xf32>
    %25 = arith.minimumf %22, %24 : vector<8x128xf32>
    %26 = vector.extract_strided_slice %20 {offsets = [2, 0, 0], sizes = [1, 8, 128], strides = [1, 1, 1]} : vector<4x8x128xf32> to vector<1x8x128xf32>
    %27 = vector.shape_cast %26 : vector<1x8x128xf32> to vector<8x128xf32>
    %28 = arith.minimumf %25, %27 : vector<8x128xf32>
    %29 = vector.extract_strided_slice %20 {offsets = [3, 0, 0], sizes = [1, 8, 128], strides = [1, 1, 1]} : vector<4x8x128xf32> to vector<1x8x128xf32>
    %30 = vector.shape_cast %29 : vector<1x8x128xf32> to vector<8x128xf32>
    %31 = arith.minimumf %28, %30 : vector<8x128xf32>
    %32 = math.absf %31 : vector<8x128xf32>
    %cst_15 = arith.constant dense<0.000000e+00> : vector<128xf32>
    %33 = vector.multi_reduction <add>, %32, %cst_15 [0] : vector<8x128xf32> to vector<128xf32>
    %34 = vector.shape_cast %33 : vector<128xf32> to vector<1x128xf32>
    %cst_16 = arith.constant 9.99999996E-13 : f32
    %35 = vector.broadcast %cst_16 : f32 to vector<1x128xf32>
    %36 = arith.maximumf %34, %35 : vector<1x128xf32>
    %37 = vector.broadcast %36 : vector<1x128xf32> to vector<8x128xf32>
    %38 = arith.divf %31, %37 : vector<8x128xf32>
    %39 = vector.shape_cast %38 : vector<8x128xf32> to vector<1x8x128xf32>
    %40 = vector.broadcast %0 : vector<4x1x128xf32> to vector<4x8x128xf32>
    %41 = vector.broadcast %39 : vector<1x8x128xf32> to vector<4x8x128xf32>
    %42 = arith.mulf %40, %41 : vector<4x8x128xf32>
    %43 = vector.shape_cast %42 : vector<4x8x128xf32> to vector<32x128xf32>
    %c0_17 = arith.constant 0 : index
    %c0_18 = arith.constant 0 : index
    %44 = vector.load %arg6[%c0_17, %c0_18] : memref<12x8xf32, #tpu.memory_space<vmem>>, vector<12x8xf32>
    %cst_19 = arith.constant dense<0.000000e+00> : vector<12x128xf32>
    %45 = tpu.matmul %44, %38, %cst_19 {dimension_numbers = #tpu.dot_dimension_numbers<[1], [0], [0], [1], [0, 0, 1, 1], [], []>} : vector<12x8xf32>, vector<8x128xf32>, vector<12x128xf32> -> vector<12x128xf32>
    %c0_20 = arith.constant 0 : index
    %c0_21 = arith.constant 0 : index
    %46 = vector.load %arg7[%c0_20, %c0_21] : memref<4x8xf32, #tpu.memory_space<vmem>>, vector<4x8xf32>
    %cst_22 = arith.constant dense<0.000000e+00> : vector<4x128xf32>
    %47 = tpu.matmul %46, %38, %cst_22 {dimension_numbers = #tpu.dot_dimension_numbers<[1], [0], [0], [1], [0, 0, 1, 1], [], []>} : vector<4x8xf32>, vector<8x128xf32>, vector<4x128xf32> -> vector<4x128xf32>
    %c0_23 = arith.constant 0 : index
    %c0_24 = arith.constant 0 : index
    %48 = vector.load %arg8[%c0_23, %c0_24] : memref<4x32xf32, #tpu.memory_space<vmem>>, vector<4x32xf32>
    %cst_25 = arith.constant dense<0.000000e+00> : vector<4x128xf32>
    %49 = tpu.matmul %48, %43, %cst_25 {dimension_numbers = #tpu.dot_dimension_numbers<[1], [0], [0], [1], [0, 0, 1, 1], [], []>} : vector<4x32xf32>, vector<32x128xf32>, vector<4x128xf32> -> vector<4x128xf32>
    %50 = arith.addf %47, %49 : vector<4x128xf32>
    %c0_26 = arith.constant 0 : index
    %c0_27 = arith.constant 0 : index
    %51 = vector.load %arg9[%c0_26, %c0_27] : memref<12x1xf32, #tpu.memory_space<vmem>>, vector<12x1xf32>
    %52 = vector.broadcast %51 : vector<12x1xf32> to vector<12x128xf32>
    %53 = arith.addf %45, %52 : vector<12x128xf32>
    %cst_28 = arith.constant 0.000000e+00 : f32
    %54 = vector.broadcast %cst_28 : f32 to vector<12x128xf32>
    %55 = arith.maximumf %53, %54 : vector<12x128xf32>
    %c0_29 = arith.constant 0 : index
    %c0_30 = arith.constant 0 : index
    %56 = vector.load %arg10[%c0_29, %c0_30] : memref<4x12xf32, #tpu.memory_space<vmem>>, vector<4x12xf32>
    %cst_31 = arith.constant dense<0.000000e+00> : vector<4x128xf32>
    %57 = tpu.matmul %56, %55, %cst_31 {dimension_numbers = #tpu.dot_dimension_numbers<[1], [0], [0], [1], [0, 0, 1, 1], [], []>} : vector<4x12xf32>, vector<12x128xf32>, vector<4x128xf32> -> vector<4x128xf32>
    %c0_32 = arith.constant 0 : index
    %c0_33 = arith.constant 0 : index
    %58 = vector.load %arg11[%c0_32, %c0_33] : memref<4x1xf32, #tpu.memory_space<vmem>>, vector<4x1xf32>
    %59 = vector.broadcast %58 : vector<4x1xf32> to vector<4x128xf32>
    %60 = arith.addf %57, %59 : vector<4x128xf32>
    %61 = math.absf %50 : vector<4x128xf32>
    %cst_34 = arith.constant dense<0.000000e+00> : vector<128xf32>
    %62 = vector.multi_reduction <add>, %61, %cst_34 [0] : vector<4x128xf32> to vector<128xf32>
    %63 = vector.shape_cast %62 : vector<128xf32> to vector<1x128xf32>
    %cst_35 = arith.constant 9.99999996E-13 : f32
    %64 = vector.broadcast %cst_35 : f32 to vector<1x128xf32>
    %65 = arith.maximumf %63, %64 : vector<1x128xf32>
    %66 = vector.broadcast %65 : vector<1x128xf32> to vector<4x128xf32>
    %67 = arith.divf %50, %66 : vector<4x128xf32>
    %c0_36 = arith.constant 0 : index
    %c0_37 = arith.constant 0 : index
    %68 = vector.load %arg12[%c0_36, %c0_37] : memref<8x128xf32, #tpu.memory_space<vmem>>, vector<4x128xf32>
    tpu.vector_store %arg12[%c0_36, %c0_37], %67 {strides = array<i32>} : memref<8x128xf32, #tpu.memory_space<vmem>>, vector<4x128xf32>,
    %c4 = arith.constant 4 : index
    %c0_38 = arith.constant 0 : index
    %69 = vector.load %arg12[%c4, %c0_38] : memref<8x128xf32, #tpu.memory_space<vmem>>, vector<4x128xf32>
    tpu.vector_store %arg12[%c4, %c0_38], %60 {strides = array<i32>} : memref<8x128xf32, #tpu.memory_space<vmem>>, vector<4x128xf32>,
    return
  }
  func.func @transform_0(%arg0: i32) -> (i32, i32, i32) {
    %c0_i32 = arith.constant 0 : i32
    %c0_i32_0 = arith.constant 0 : i32
    %c0_i32_1 = arith.constant 0 : i32
    return %c0_i32, %c0_i32_0, %arg0 : i32, i32, i32
  }
  func.func @transform_1(%arg0: i32) -> (i32, i32, i32) {
    %c0_i32 = arith.constant 0 : i32
    %c0_i32_0 = arith.constant 0 : i32
    %c0_i32_1 = arith.constant 0 : i32
    %c0_i32_2 = arith.constant 0 : i32
    return %c0_i32, %c0_i32_0, %c0_i32_1 : i32, i32, i32
  }
  func.func @transform_2(%arg0: i32) -> (i32, i32, i32) {
    %c0_i32 = arith.constant 0 : i32
    %c0_i32_0 = arith.constant 0 : i32
    %c0_i32_1 = arith.constant 0 : i32
    %c0_i32_2 = arith.constant 0 : i32
    return %c0_i32, %c0_i32_0, %c0_i32_1 : i32, i32, i32
  }
  func.func @transform_3(%arg0: i32) -> (i32, i32, i32) {
    %c0_i32 = arith.constant 0 : i32
    %c0_i32_0 = arith.constant 0 : i32
    %c0_i32_1 = arith.constant 0 : i32
    %c0_i32_2 = arith.constant 0 : i32
    return %c0_i32, %c0_i32_0, %c0_i32_1 : i32, i32, i32
  }
  func.func @transform_4(%arg0: i32) -> (i32, i32, i32) {
    %c0_i32 = arith.constant 0 : i32
    %c0_i32_0 = arith.constant 0 : i32
    %c0_i32_1 = arith.constant 0 : i32
    %c0_i32_2 = arith.constant 0 : i32
    return %c0_i32, %c0_i32_0, %c0_i32_1 : i32, i32, i32
  }
  func.func @transform_5(%arg0: i32) -> (i32, i32) {
    %c0_i32 = arith.constant 0 : i32
    %c0_i32_0 = arith.constant 0 : i32
    %c0_i32_1 = arith.constant 0 : i32
    return %c0_i32, %c0_i32_0 : i32, i32
  }
  func.func @transform_6(%arg0: i32) -> (i32, i32) {
    %c0_i32 = arith.constant 0 : i32
    %c0_i32_0 = arith.constant 0 : i32
    %c0_i32_1 = arith.constant 0 : i32
    return %c0_i32, %c0_i32_0 : i32, i32
  }
  func.func @transform_7(%arg0: i32) -> (i32, i32) {
    %c0_i32 = arith.constant 0 : i32
    %c0_i32_0 = arith.constant 0 : i32
    %c0_i32_1 = arith.constant 0 : i32
    return %c0_i32, %c0_i32_0 : i32, i32
  }
  func.func @transform_8(%arg0: i32) -> (i32, i32) {
    %c0_i32 = arith.constant 0 : i32
    %c0_i32_0 = arith.constant 0 : i32
    %c0_i32_1 = arith.constant 0 : i32
    return %c0_i32, %c0_i32_0 : i32, i32
  }
  func.func @transform_9(%arg0: i32) -> (i32, i32) {
    %c0_i32 = arith.constant 0 : i32
    %c0_i32_0 = arith.constant 0 : i32
    %c0_i32_1 = arith.constant 0 : i32
    return %c0_i32, %c0_i32_0 : i32, i32
  }
  func.func @transform_10(%arg0: i32) -> (i32, i32) {
    %c0_i32 = arith.constant 0 : i32
    %c0_i32_0 = arith.constant 0 : i32
    %c0_i32_1 = arith.constant 0 : i32
    return %c0_i32, %c0_i32_0 : i32, i32
  }
  func.func @transform_11(%arg0: i32) -> (i32, i32) {
    %c0_i32 = arith.constant 0 : i32
    %c0_i32_0 = arith.constant 0 : i32
    return %c0_i32, %arg0 : i32, i32
  }
}

</mosaic_0001>

<llo_original>
// kernel: anfis_forward.1
$region0: #{anfis_forward.1}
  #allocation0 [shape = 'u32[]', space=smem, size = 0x4, offset = 0x4, fixed_abs, tag = 'smem constant byte address 0x4 - core index']
  #allocation1 [shape = 'u32[72,128]{1,0:T(1,128)}', space=vmem, size = 0x9000, scoped, tag = 'internal scratch']
  %s0 = inlined_call_operand.vmem [shape: f32[4,1,128], index: 0, kind: input, shape index: {}]
  %s1 = inlined_call_operand.vmem [shape: f32[4,8,1], index: 1, kind: input, shape index: {}]
  %s2 = inlined_call_operand.vmem [shape: f32[4,8,1], index: 2, kind: input, shape index: {}]
  %s3 = inlined_call_operand.vmem [shape: f32[4,8,1], index: 3, kind: input, shape index: {}]
  %s4 = inlined_call_operand.vmem [shape: f32[4,8,1], index: 4, kind: input, shape index: {}]
  %s5 = inlined_call_operand.vmem [shape: f32[12,8], index: 5, kind: input, shape index: {}]
  %s6 = inlined_call_operand.vmem [shape: f32[4,8], index: 6, kind: input, shape index: {}]
  %s7 = inlined_call_operand.vmem [shape: f32[4,32], index: 7, kind: input, shape index: {}]
  %s8 = inlined_call_operand.vmem [shape: f32[12,1], index: 8, kind: input, shape index: {}]
  %s9 = inlined_call_operand.vmem [shape: f32[4,12], index: 9, kind: input, shape index: {}]
  %s10 = inlined_call_operand.vmem [shape: f32[4,1], index: 10, kind: input, shape index: {}]
  %s11 = inlined_call_operand.vmem [shape: f32[8,128], index: 11, kind: output, shape index: {}]
  %s12 = sld [smem:[#allocation0]]
  $region54: #{anfis_forward.1} parent=0
    _
  %s14 = ssub.s32 1, %s12
  %s15 = scalar_select 0, %s14, %s12
  // Predicated region
  $region2: #{anfis_forward.1} parent=0 // pred_check
    _
  $region3: #{anfis_forward.1} parent=0 // pred_check_branch
    %17 = sbr.rel (0) target = $region5
  $region4: #{anfis_forward.1} parent=0 // pred_region
    _
  $region5: #{anfis_forward.1} parent=0 // pred_fallthru
    _
  // Predicated region
  $region6: #{anfis_forward.1} parent=0 // pred_check
    _
  $region7: #{anfis_forward.1} parent=0 // pred_check_branch
    %19 = sbr.rel (0) target = $region9
  $region8: #{anfis_forward.1} parent=0 // pred_region
    _
  $region9: #{anfis_forward.1} parent=0 // pred_fallthru
    _
  // Predicated region
  $region10: #{anfis_forward.1} parent=0 // pred_check
    _
  $region11: #{anfis_forward.1} parent=0 // pred_check_branch
    %21 = sbr.rel (0) target = $region13
  $region12: #{anfis_forward.1} parent=0 // pred_region
    _
  $region13: #{anfis_forward.1} parent=0 // pred_fallthru
    _
  // Predicated region
  $region14: #{anfis_forward.1} parent=0 // pred_check
    _
  $region15: #{anfis_forward.1} parent=0 // pred_check_branch
    %23 = sbr.rel (0) target = $region17
  $region16: #{anfis_forward.1} parent=0 // pred_region
    _
  $region17: #{anfis_forward.1} parent=0 // pred_fallthru
    _
  // Predicated region
  $region18: #{anfis_forward.1} parent=0 // pred_check
    _
  $region19: #{anfis_forward.1} parent=0 // pred_check_branch
    %25 = sbr.rel (0) target = $region21
  $region20: #{anfis_forward.1} parent=0 // pred_region
    _
  $region21: #{anfis_forward.1} parent=0 // pred_fallthru
    _
  // Predicated region
  $region22: #{anfis_forward.1} parent=0 // pred_check
    _
  $region23: #{anfis_forward.1} parent=0 // pred_check_branch
    %27 = sbr.rel (0) target = $region25
  $region24: #{anfis_forward.1} parent=0 // pred_region
    _
  $region25: #{anfis_forward.1} parent=0 // pred_fallthru
    _
  // Predicated region
  $region26: #{anfis_forward.1} parent=0 // pred_check
    _
  $region27: #{anfis_forward.1} parent=0 // pred_check_branch
    %29 = sbr.rel (0) target = $region29
  $region28: #{anfis_forward.1} parent=0 // pred_region
    _
  $region29: #{anfis_forward.1} parent=0 // pred_fallthru
    _
  // Predicated region
  $region30: #{anfis_forward.1} parent=0 // pred_check
    _
  $region31: #{anfis_forward.1} parent=0 // pred_check_branch
    %31 = sbr.rel (0) target = $region33
  $region32: #{anfis_forward.1} parent=0 // pred_region
    _
  $region33: #{anfis_forward.1} parent=0 // pred_fallthru
    _
  // Predicated region
  $region34: #{anfis_forward.1} parent=0 // pred_check
    _
  $region35: #{anfis_forward.1} parent=0 // pred_check_branch
    %33 = sbr.rel (0) target = $region37
  $region36: #{anfis_forward.1} parent=0 // pred_region
    _
  $region37: #{anfis_forward.1} parent=0 // pred_fallthru
    _
  // Predicated region
  $region38: #{anfis_forward.1} parent=0 // pred_check
    _
  $region39: #{anfis_forward.1} parent=0 // pred_check_branch
    %35 = sbr.rel (0) target = $region41
  $region40: #{anfis_forward.1} parent=0 // pred_region
    _
  $region41: #{anfis_forward.1} parent=0 // pred_fallthru
    _
  // Predicated region
  $region42: #{anfis_forward.1} parent=0 // pred_check
    _
  $region43: #{anfis_forward.1} parent=0 // pred_check_branch
    %37 = sbr.rel (0) target = $region45
  $region44: #{anfis_forward.1} parent=0 // pred_region
    _
  $region45: #{anfis_forward.1} parent=0 // pred_fallthru
    _
  %v38 = vld [vmem:[%s0] sm:$0x1]
  %v39 = vld [vmem:[%s0 + $0x1] sm:$0x1]
  %v40 = vld [vmem:[%s0 + $0x2] sm:$0x1]
  %v41 = vld [vmem:[%s0 + $0x3] sm:$0x1]
  %v42 = vld [vmem:[%s1] sm:$0xff]
  %v43 = vld [vmem:[%s1 + $0x8] sm:$0xff]
  %v44 = vld [vmem:[%s1 + $0x10] sm:$0xff]
  %v45 = vld [vmem:[%s1 + $0x18] sm:$0xff]
  %v46 = vld [vmem:[%s2] sm:$0xff]
  %v47 = vld [vmem:[%s2 + $0x8] sm:$0xff]
  %v48 = vld [vmem:[%s2 + $0x10] sm:$0xff]
  %v49 = vld [vmem:[%s2 + $0x18] sm:$0xff]
  %v50 = vld [vmem:[%s3] sm:$0xff]
  %v51 = vld [vmem:[%s3 + $0x8] sm:$0xff]
  %v52 = vld [vmem:[%s3 + $0x10] sm:$0xff]
  %v53 = vld [vmem:[%s3 + $0x18] sm:$0xff]
  %v54 = vld [vmem:[%s4] sm:$0xff]
  %v55 = vld [vmem:[%s4 + $0x8] sm:$0xff]
  %v56 = vld [vmem:[%s4 + $0x10] sm:$0xff]
  %v57 = vld [vmem:[%s4 + $0x18] sm:$0xff]
  %v62 = vperm.slane %v38, 0
  %v63 = vperm.slane %v39, 0
  %v64 = vperm.slane %v40, 0
  %v65 = vperm.slane %v41, 0
  %71 = vset.pattern.permute.xlu0 0
  %72 = vperm.xlu0 %71, %v42
  %v73 = vpop.permute.xlu0 %72
  %76 = vset.pattern.permute.xlu0 0
  %77 = vperm.xlu0 %76, %v43
  %v78 = vpop.permute.xlu0 %77
  %81 = vset.pattern.permute.xlu0 0
  %82 = vperm.xlu0 %81, %v44
  %v83 = vpop.permute.xlu0 %82
  %86 = vset.pattern.permute.xlu0 0
  %87 = vperm.xlu0 %86, %v45
  %v88 = vpop.permute.xlu0 %87
  %v90 = vsub.f32 %v62, %v73
  %v91 = vsub.f32 %v63, %v78
  %v92 = vsub.f32 %v64, %v83
  %v93 = vsub.f32 %v65, %v88
  %v94 = vmul.f32 %v90, %v90
  %v95 = vmul.f32 %v91, %v91
  %v96 = vmul.f32 %v92, %v92
  %v97 = vmul.f32 %v93, %v93
  %v98 = vsub.f32 0.0, %v94
  %v99 = vsub.f32 0.0, %v95
  %v100 = vsub.f32 0.0, %v96
  %v101 = vsub.f32 0.0, %v97
  %103 = vset.pattern.permute.xlu0 0
  %104 = vperm.xlu0 %103, %v46
  %v105 = vpop.permute.xlu0 %104
  %108 = vset.pattern.permute.xlu0 0
  %109 = vperm.xlu0 %108, %v47
  %v110 = vpop.permute.xlu0 %109
  %113 = vset.pattern.permute.xlu0 0
  %114 = vperm.xlu0 %113, %v48
  %v115 = vpop.permute.xlu0 %114
  %118 = vset.pattern.permute.xlu0 0
  %119 = vperm.xlu0 %118, %v49
  %v120 = vpop.permute.xlu0 %119
  %v122 = vmul.f32 %v98, %v105
  %v123 = vmul.f32 %v99, %v110
  %v124 = vmul.f32 %v100, %v115
  %v125 = vmul.f32 %v101, %v120
  %v126 = vmul.f32 %v122, 1.442695
  %v127 = vpow.pop %v126
  %v128 = vmul.f32 %v123, 1.442695
  %v129 = vpow.pop %v128
  %v130 = vmul.f32 %v124, 1.442695
  %v131 = vpow.pop %v130
  %v132 = vmul.f32 %v125, 1.442695
  %v133 = vpow.pop %v132
  %v134 = vadd.f32 %v127, 1e-06
  %v135 = vadd.f32 %v129, 1e-06
  %v136 = vadd.f32 %v131, 1e-06
  %v137 = vadd.f32 %v133, 1e-06
  %139 = vset.pattern.permute.xlu0 0
  %140 = vperm.xlu0 %139, %v54
  %v141 = vpop.permute.xlu0 %140
  %144 = vset.pattern.permute.xlu0 0
  %145 = vperm.xlu0 %144, %v55
  %v146 = vpop.permute.xlu0 %145
  %149 = vset.pattern.permute.xlu0 0
  %150 = vperm.xlu0 %149, %v56
  %v151 = vpop.permute.xlu0 %150
  %154 = vset.pattern.permute.xlu0 0
  %155 = vperm.xlu0 %154, %v57
  %v156 = vpop.permute.xlu0 %155
  %v158 = vmul.f32 %v141, %v127
  %v159 = vmul.f32 %v146, %v129
  %v160 = vmul.f32 %v151, %v131
  %v161 = vmul.f32 %v156, %v133
  %163 = vset.pattern.permute.xlu0 0
  %164 = vperm.xlu0 %163, %v50
  %v165 = vpop.permute.xlu0 %164
  %168 = vset.pattern.permute.xlu0 0
  %169 = vperm.xlu0 %168, %v51
  %v170 = vpop.permute.xlu0 %169
  %173 = vset.pattern.permute.xlu0 0
  %174 = vperm.xlu0 %173, %v52
  %v175 = vpop.permute.xlu0 %174
  %178 = vset.pattern.permute.xlu0 0
  %179 = vperm.xlu0 %178, %v53
  %v180 = vpop.permute.xlu0 %179
  %v182 = vadd.f32 %v158, %v165
  %v183 = vadd.f32 %v159, %v170
  %v184 = vadd.f32 %v160, %v175
  %v185 = vadd.f32 %v161, %v180
  %v186 = vrcp.pop %v182
  %v187 = vmul.f32 %v182, %v186
  %v188 = vsub.f32 1.0, %v187
  %v189 = vmul.f32 %v186, %v188
  %v190 = vadd.f32 %v186, %v189
  %vm191 = vweird.f32 %v182
  %vm192 = vweird.f32 %v186
  %vm193 = vmor %vm191, %vm192
  %v194 = vsel %vm193, %v186, %v190
  %v195 = vand.u32 2147483647, %v182
  %vm196 = vcmp.eq.f32.partialorder %v195, 8.507059e+37
  %v197 = vand.u32 %v182, 2147483648
  %v198 = vor.u32 1.1754944e-38, %v197
  %v199 = vsel %vm196, %v198, %v194
  %v200 = vmul.f32 %v134, %v199
  %v201 = vrcp.pop %v183
  %v202 = vmul.f32 %v183, %v201
  %v203 = vsub.f32 1.0, %v202
  %v204 = vmul.f32 %v201, %v203
  %v205 = vadd.f32 %v201, %v204
  %vm206 = vweird.f32 %v183
  %vm207 = vweird.f32 %v201
  %vm208 = vmor %vm206, %vm207
  %v209 = vsel %vm208, %v201, %v205
  %v210 = vand.u32 2147483647, %v183
  %vm211 = vcmp.eq.f32.partialorder %v210, 8.507059e+37
  %v212 = vand.u32 %v183, 2147483648
  %v213 = vor.u32 1.1754944e-38, %v212
  %v214 = vsel %vm211, %v213, %v209
  %v215 = vmul.f32 %v135, %v214
  %v216 = vrcp.pop %v184
  %v217 = vmul.f32 %v184, %v216
  %v218 = vsub.f32 1.0, %v217
  %v219 = vmul.f32 %v216, %v218
  %v220 = vadd.f32 %v216, %v219
  %vm221 = vweird.f32 %v184
  %vm222 = vweird.f32 %v216
  %vm223 = vmor %vm221, %vm222
  %v224 = vsel %vm223, %v216, %v220
  %v225 = vand.u32 2147483647, %v184
  %vm226 = vcmp.eq.f32.partialorder %v225, 8.507059e+37
  %v227 = vand.u32 %v184, 2147483648
  %v228 = vor.u32 1.1754944e-38, %v227
  %v229 = vsel %vm226, %v228, %v224
  %v230 = vmul.f32 %v136, %v229
  %v231 = vrcp.pop %v185
  %v232 = vmul.f32 %v185, %v231
  %v233 = vsub.f32 1.0, %v232
  %v234 = vmul.f32 %v231, %v233
  %v235 = vadd.f32 %v231, %v234
  %vm236 = vweird.f32 %v185
  %vm237 = vweird.f32 %v231
  %vm238 = vmor %vm236, %vm237
  %v239 = vsel %vm238, %v231, %v235
  %v240 = vand.u32 2147483647, %v185
  %vm241 = vcmp.eq.f32.partialorder %v240, 8.507059e+37
  %v242 = vand.u32 %v185, 2147483648
  %v243 = vor.u32 1.1754944e-38, %v242
  %v244 = vsel %vm241, %v243, %v239
  %v245 = vmul.f32 %v137, %v244
  %v246 = vmin.f32 %v200, %v215
  %v247 = vmin.f32 %v246, %v230
  %v248 = vmin.f32 %v247, %v245
  %v249 = vand.u32 2147483647, %v248
  %v250 = vrot.slane %v249, 4
  %v251 = vadd.f32 %v249, %v250
  %v252 = vrot.slane %v251, 2
  %v253 = vadd.f32 %v251, %v252
  %v254 = vrot.slane %v253, 1
  %v255 = vadd.f32 %v253, %v254
  %v256 = vmax.f32 %v255, 1e-12
  %v257 = vrcp.pop %v256
  %v258 = vmul.f32 %v256, %v257
  %v259 = vsub.f32 1.0, %v258
  %v260 = vmul.f32 %v257, %v259
  %v261 = vadd.f32 %v257, %v260
  %vm262 = vweird.f32 %v256
  %vm263 = vweird.f32 %v257
  %vm264 = vmor %vm262, %vm263
  %v265 = vsel %vm264, %v257, %v261
  %v266 = vand.u32 2147483647, %v256
  %vm267 = vcmp.eq.f32.partialorder %v266, 8.507059e+37
  %v268 = vand.u32 %v256, 2147483648
  %v269 = vor.u32 1.1754944e-38, %v268
  %v270 = vsel %vm267, %v269, %v265
  %v271 = vmul.f32 %v248, %v270
  %v272 = vmul.f32 %v62, %v271
  %v273 = vmul.f32 %v63, %v271
  %v274 = vmul.f32 %v64, %v271
  %v275 = vmul.f32 %v65, %v271
  %v276 = vld [vmem:[%s5] sm:$0xff]
  %v277 = vld [vmem:[%s5 + $0x8] sm:$0xf]
  %v278 = vld [vmem:[%s6] sm:$0xf]
  %v279 = vld [vmem:[%s7] sm:$0xf]
  %vm280 = vcmask 261120
  %v282 = vsel %vm280, %v279, 0
  %284 = vmatpush.msra.mxu0 0.0
  %285 = vmatpush.msra.mxu0 0.0
  %286 = vmatpush.msra.mxu0 0.0
  %287 = vmatpush.msra.mxu0 0.0
  %288 = vmatpush.msra.mxu0 0.0
  %289 = vmatpush.msra.mxu0 0.0
  %290 = vmatpush.msra.mxu0 0.0
  %291 = vmatpush.msra.mxu0 0.0
  %292 = vmatpush.msra.mxu0 0.0
  %293 = vmatpush.msra.mxu0 0.0
  %294 = vmatpush.msra.mxu0 0.0
  %295 = vmatpush.msra.mxu0 0.0
  %296 = vmatpush.msra.mxu0 %v275
  %297 = vmatpush.msra.mxu0 %v274
  %298 = vmatpush.msra.mxu0 %v273
  %299 = vmatpush.msra.mxu0 %v272
  %300 = vmatmul.f32.gmra.mxu0 %v282
  %v301 = vpop.f32.mrf.mxu0
  %v302 = vadd.f32 0.0, %v301
  %303 = vdwg.mxu0
  %vm304 = vcmask 64512
  %v306 = vsel %vm304, %v278, 0
  %308 = vmatpush.msra.mxu0 0.0
  %309 = vmatpush.msra.mxu0 0.0
  %310 = vmatpush.msra.mxu0 0.0
  %311 = vmatpush.msra.mxu0 0.0
  %312 = vmatpush.msra.mxu0 0.0
  %313 = vmatpush.msra.mxu0 0.0
  %314 = vmatpush.msra.mxu0 0.0
  %315 = vmatpush.msra.mxu0 0.0
  %316 = vmatpush.msra.mxu0 0.0
  %317 = vmatpush.msra.mxu0 0.0
  %318 = vmatpush.msra.mxu0 0.0
  %319 = vmatpush.msra.mxu0 0.0
  %320 = vmatpush.msra.mxu0 0.0
  %321 = vmatpush.msra.mxu0 0.0
  %322 = vmatpush.msra.mxu0 0.0
  %323 = vmatpush.msra.mxu0 %v271
  %324 = vmatmul.f32.gmra.mxu0 %v306
  %v325 = vpop.f32.mrf.mxu0
  %v326 = vadd.f32 %v302, %v325
  %327 = vdwg.mxu0
  %v328 = vld [vmem:[%s8] sm:$0xff]
  %v329 = vld [vmem:[%s8 + $0x8] sm:$0xf]
  %331 = vset.pattern.permute.xlu0 0
  %332 = vperm.xlu0 %331, %v328
  %v333 = vpop.permute.xlu0 %332
  %336 = vset.pattern.permute.xlu0 0
  %337 = vperm.xlu0 %336, %v329
  %v338 = vpop.permute.xlu0 %337
  %v341 = vsel %vm304, %v276, 0
  %v344 = vsel %vm304, %v277, 0
  %346 = vmatpush.msra.mxu0 0.0
  %347 = vmatpush.msra.mxu0 0.0
  %348 = vmatpush.msra.mxu0 0.0
  %349 = vmatpush.msra.mxu0 0.0
  %350 = vmatpush.msra.mxu0 0.0
  %351 = vmatpush.msra.mxu0 0.0
  %352 = vmatpush.msra.mxu0 0.0
  %353 = vmatpush.msra.mxu0 0.0
  %354 = vmatpush.msra.mxu0 0.0
  %355 = vmatpush.msra.mxu0 0.0
  %356 = vmatpush.msra.mxu0 0.0
  %357 = vmatpush.msra.mxu0 0.0
  %358 = vmatpush.msra.mxu0 0.0
  %359 = vmatpush.msra.mxu0 0.0
  %360 = vmatpush.msra.mxu0 0.0
  %361 = vmatpush.msra.mxu0 %v271
  %362 = vmatmul.f32.gmra.mxu0 %v341
  %v363 = vpop.f32.mrf.mxu0
  %v364 = vadd.f32 %v333, %v363
  %365 = vmatmul.f32.gmra.mxu0 %v344
  %v366 = vpop.f32.mrf.mxu0
  %v367 = vadd.f32 %v338, %v366
  %368 = vdwg.mxu0
  %v369 = vmax.f32 %v364, 0.0
  %v370 = vmax.f32 %v367, 0.0
  %v371 = vld [vmem:[%s9] sm:$0xf]
  %v372 = vld [vmem:[%s10] sm:$0xf]
  %374 = vset.pattern.permute.xlu0 0
  %375 = vperm.xlu0 %374, %v372
  %v376 = vpop.permute.xlu0 %375
  %vm378 = vcmask 97280
  %v380 = vsel %vm378, %v371, 0
  %vm382 = vcmask 1043456
  %v384 = vsel %vm382, %v370, 0
  %386 = vmatpush.msra.mxu0 0.0
  %387 = vmatpush.msra.mxu0 0.0
  %388 = vmatpush.msra.mxu0 0.0
  %389 = vmatpush.msra.mxu0 0.0
  %390 = vmatpush.msra.mxu0 0.0
  %391 = vmatpush.msra.mxu0 0.0
  %392 = vmatpush.msra.mxu0 0.0
  %393 = vmatpush.msra.mxu0 0.0
  %394 = vmatpush.msra.mxu0 0.0
  %395 = vmatpush.msra.mxu0 0.0
  %396 = vmatpush.msra.mxu0 0.0
  %397 = vmatpush.msra.mxu0 0.0
  %398 = vmatpush.msra.mxu0 0.0
  %399 = vmatpush.msra.mxu0 0.0
  %400 = vmatpush.msra.mxu0 %v384
  %401 = vmatpush.msra.mxu0 %v369
  %402 = vmatmul.f32.gmra.mxu0 %v380
  %v403 = vpop.f32.mrf.mxu0
  %v404 = vadd.f32 %v376, %v403
  %405 = vdwg.mxu0
  %v406 = vand.u32 2147483647, %v326
  %v407 = vsel %vm382, %v406, 0.0
  %v408 = vrot.slane %v407, 4
  %v409 = vadd.f32 %v407, %v408
  %v410 = vrot.slane %v409, 2
  %v411 = vadd.f32 %v409, %v410
  %v412 = vrot.slane %v411, 1
  %v413 = vadd.f32 %v411, %v412
  %v414 = vmax.f32 %v413, 1e-12
  %v415 = vrcp.pop %v414
  %v416 = vmul.f32 %v414, %v415
  %v417 = vsub.f32 1.0, %v416
  %v418 = vmul.f32 %v415, %v417
  %v419 = vadd.f32 %v415, %v418
  %vm420 = vweird.f32 %v414
  %vm421 = vweird.f32 %v415
  %vm422 = vmor %vm420, %vm421
  %v423 = vsel %vm422, %v415, %v419
  %v424 = vand.u32 2147483647, %v414
  %vm425 = vcmp.eq.f32.partialorder %v424, 8.507059e+37
  %v426 = vand.u32 %v414, 2147483648
  %v427 = vor.u32 1.1754944e-38, %v426
  %v428 = vsel %vm425, %v427, %v423
  %v429 = vmul.f32 %v326, %v428
  %430 = vst [vmem:[%s11] sm:$0xf] %v429
  %431 = vst [vmem:[%s11 + $0x4] sm:$0xf] %v404
  // Predicated region
  $region46: #{anfis_forward.1} parent=0 // pred_check
    _
  $region47: #{anfis_forward.1} parent=0 // pred_check_branch
    %433 = sbr.rel (0) target = $region49
  $region48: #{anfis_forward.1} parent=0 // pred_region
    _
  $region49: #{anfis_forward.1} parent=0 // pred_fallthru
    _
  // Predicated region
  $region50: #{anfis_forward.1} parent=0 // pred_check
    _
  $region51: #{anfis_forward.1} parent=0 // pred_check_branch
    %435 = sbr.rel (0) target = $region53
  $region52: #{anfis_forward.1} parent=0 // pred_region
    _
  $region53: #{anfis_forward.1} parent=0 // pred_fallthru
    _

</llo_original>
